<compile_context>
chip_gen: v7x
topology: tpu7x:2x2x1
jax: 0.10.0
libtpu: 0.0.40
codegen_flags: <defaults>
</compile_context>

<pallas_src>
import math
import functools

import jax
import jax.numpy as jnp
from jax.experimental import pallas as pl
from jax.experimental.pallas import tpu as pltpu


def _attn_head_kernel(xq_ref, xkv_ref, w_ref, o_ref,
                      q_sc, m_sc, l_sc, acc_sc,
                      *, head_size, q_tile, kv_tile):
    # xq_ref:  (q_tile, C)   query-side rows of x for this (b, qi)
    # xkv_ref: (kv_tile, C)  key/value-side rows of x for this (b, ki)
    # w_ref:   (C, 3H)       fused [wk | wq | wv]
    # o_ref:   (q_tile, H)
    # scratch: q_sc (q_tile,H) f32, m_sc/l_sc (q_tile,1) f32, acc_sc (q_tile,H) f32
    H = head_size
    qi = pl.program_id(1)
    ki = pl.program_id(2)

    @pl.when(ki == 0)
    def _init():
        # One fused projection for the q tile; scale folded into q once.
        xq = xq_ref[...].astype(jnp.bfloat16)
        w = w_ref[...].astype(jnp.bfloat16)
        qkv = jnp.dot(xq, w, preferred_element_type=jnp.float32)        # (tq, 3H)
        q_sc[...] = qkv[:, H:2 * H] * (H ** -0.5)
        m_sc[...] = jnp.full(m_sc.shape, -jnp.inf, dtype=m_sc.dtype)
        l_sc[...] = jnp.zeros(l_sc.shape, l_sc.dtype)
        acc_sc[...] = jnp.zeros(acc_sc.shape, acc_sc.dtype)

    # Skip kv blocks that lie entirely above the causal diagonal.
    @pl.when(ki * kv_tile <= qi * q_tile + (q_tile - 1))
    def _block():
        xkv = xkv_ref[...].astype(jnp.bfloat16)
        w = w_ref[...].astype(jnp.bfloat16)
        kqv = jnp.dot(xkv, w, preferred_element_type=jnp.float32)       # (tkv, 3H)
        k = kqv[:, 0:H]
        v = kqv[:, 2 * H:3 * H]

        # s = q @ k^T without an explicit transpose (contract last dims).
        s = jax.lax.dot_general(
            q_sc[...].astype(jnp.bfloat16), k.astype(jnp.bfloat16),
            (((1,), (1,)), ((), ())),
            preferred_element_type=jnp.float32)                         # (tq, tkv)

        # Causal mask: keep key position <= query position.
        row = qi * q_tile + jax.lax.broadcasted_iota(jnp.int32, (q_tile, 1), 0)
        col = ki * kv_tile + jax.lax.broadcasted_iota(jnp.int32, (1, kv_tile), 1)
        s = jnp.where(col <= row, s, -jnp.inf)

        # Online softmax update.
        m_prev = m_sc[...]
        m_new = jnp.maximum(m_prev, jnp.max(s, axis=-1, keepdims=True))
        alpha = jnp.exp(m_prev - m_new)
        p = jnp.exp(s - m_new)
        l_sc[...] = alpha * l_sc[...] + jnp.sum(p, axis=-1, keepdims=True)
        acc_sc[...] = alpha * acc_sc[...] + jnp.dot(
            p.astype(jnp.bfloat16), v.astype(jnp.bfloat16),
            preferred_element_type=jnp.float32)
        m_sc[...] = m_new

    @pl.when(ki == pl.num_programs(2) - 1)
    def _finalize():
        inv_l = pl.reciprocal(l_sc[...], approx=True)
        o_ref[...] = (acc_sc[...] * inv_l).astype(o_ref.dtype)


@jax.jit
def attention_head(x, wk, wq, wv):
    B, T, C = x.shape
    H = wk.shape[1]

    # Tile sizes (full T here since T is tiny; capped for realistic T).
    q_tile = T if T <= 128 else 128
    kv_tile = T if T <= 512 else 512
    assert T % q_tile == 0 and T % kv_tile == 0

    # Fuse the three projections into a single (C, 3H) weight: [wk | wq | wv].
    w = jnp.concatenate([wk, wq, wv], axis=1)

    kernel = functools.partial(
        _attn_head_kernel, head_size=H, q_tile=q_tile, kv_tile=kv_tile)

    grid = (B, T // q_tile, T // kv_tile)
    return pl.pallas_call(
        kernel,
        out_shape=jax.ShapeDtypeStruct((B, T, H), x.dtype),
        grid_spec=pltpu.PrefetchScalarGridSpec(
            num_scalar_prefetch=0,
            grid=grid,
            in_specs=[
                # q-side rows of x
                pl.BlockSpec((pl.Squeezed(), q_tile, C),
                             lambda b, qi, ki: (b, qi, 0)),
                # kv-side rows of x
                pl.BlockSpec((pl.Squeezed(), kv_tile, C),
                             lambda b, qi, ki: (b, ki, 0)),
                # fused weights, resident across the grid
                pl.BlockSpec((C, 3 * H), lambda b, qi, ki: (0, 0)),
            ],
            out_specs=pl.BlockSpec((pl.Squeezed(), q_tile, H),
                                   lambda b, qi, ki: (b, qi, 0)),
            scratch_shapes=[
                pltpu.VMEM((q_tile, H), jnp.float32),   # q (pre-scaled)
                pltpu.VMEM((q_tile, 1), jnp.float32),   # running max m
                pltpu.VMEM((q_tile, 1), jnp.float32),   # running denom l
                pltpu.VMEM((q_tile, H), jnp.float32),   # output accumulator
            ]),
        compiler_params=pltpu.CompilerParams(
            dimension_semantics=("parallel", "parallel", "arbitrary"),
            # Conservative everywhere (v7x has only 64 MiB physical); raise for
            # larger tiles on v5e/v6e if needed.
            vmem_limit_bytes=32 * 1024 * 1024),
    )(x, x, w)


def reference_attention_head(x, wk, wq, wv):
    """Pure-JAX f32 reference mirroring the PyTorch forward pass."""
    k = x @ wk
    q = x @ wq
    v = x @ wv
    H = k.shape[-1]
    wei = (q @ jnp.swapaxes(k, -2, -1)) * (H ** -0.5)
    T = x.shape[1]
    tril = jnp.tril(jnp.ones((T, T)))
    wei = jnp.where(tril == 0, -jnp.inf, wei)
    wei = jax.nn.softmax(wei, axis=-1)
    return wei @ v


if __name__ == "__main__":
    # config: block_size = 8 (seq len), n_embd = 32, head_size = 16
    B, T, C, H = 2, 8, 32, 16

    key = jax.random.PRNGKey(0)
    kx, kk, kq, kv = jax.random.split(key, 4)

    x = jax.random.normal(kx, (B, T, C), dtype=jnp.float32)

    # nn.Linear(C, H, bias=False) default init: U(-1/sqrt(C), 1/sqrt(C)),
    # stored as (C, H) so the kernel computes x @ W.
    bound = 1.0 / math.sqrt(C)
    wk = jax.random.uniform(kk, (C, H), jnp.float32, -bound, bound)
    wq = jax.random.uniform(kq, (C, H), jnp.float32, -bound, bound)
    wv = jax.random.uniform(kv, (C, H), jnp.float32, -bound, bound)

    out = attention_head(x, wk, wq, wv)
    out = jax.block_until_ready(out)

    ref = reference_attention_head(x, wk, wq, wv)
    assert out.shape == (B, T, H)
    # bf16 MXU operands + approx reciprocal => looser tolerance than the f32 ref.
    max_err = jnp.max(jnp.abs(out - ref))
    assert jnp.allclose(out, ref, atol=5e-2, rtol=5e-2), f"max abs err {max_err}"

    print("KERNEL_OK")
</pallas_src>

<mosaic_0001>
module attributes {stable_mosaic.version = 11 : i64} {
  func.func @_attn_head_kernel(%arg0: i32, %arg1: i32, %arg2: i32, %arg3: memref<1x8x32xf32, #tpu.memory_space<vmem>>, %arg4: memref<1x8x32xf32, #tpu.memory_space<vmem>>, %arg5: memref<32x48xf32, #tpu.memory_space<vmem>>, %arg6: memref<1x8x16xf32, #tpu.memory_space<vmem>>, %arg7: memref<8x16xf32, #tpu.memory_space<vmem>>, %arg8: memref<8x1xf32, #tpu.memory_space<vmem>>, %arg9: memref<8x1xf32, #tpu.memory_space<vmem>>, %arg10: memref<8x16xf32, #tpu.memory_space<vmem>>) attributes {dimension_semantics = [#tpu.dimension_semantics<parallel>, #tpu.dimension_semantics<parallel>, #tpu.dimension_semantics<arbitrary>], iteration_bounds = array<i64: 2, 1, 1>, scalar_prefetch = 0 : i64, scratch_operands = 4 : i64, tpu.core_type = #tpu.core_type<tc>, window_params = [{transform_indices = @transform_0, window_bounds = array<i64: 1, 8, 32>}, {transform_indices = @transform_1, window_bounds = array<i64: 1, 8, 32>}, {pipeline_mode = #tpu.pipeline_mode<synchronous>, transform_indices = @transform_2, window_bounds = array<i64: 32, 48>}, {transform_indices = @transform_3, window_bounds = array<i64: 1, 8, 16>}]} {
    %c0_i32 = arith.constant 0 : i32
    %0 = arith.cmpi eq, %arg2, %c0_i32 : i32
    %1 = arith.extui %0 : i1 to i32
    %c0_i32_0 = arith.constant 0 : i32
    %2 = arith.cmpi ne, %1, %c0_i32_0 : i32
    scf.if %2 {
      %c0 = arith.constant 0 : index
      %c0_5 = arith.constant 0 : index
      %c0_6 = arith.constant 0 : index
      %12 = vector.load %arg3[%c0, %c0_5, %c0_6] : memref<1x8x32xf32, #tpu.memory_space<vmem>>, vector<1x8x32xf32>
      %13 = vector.shape_cast %12 : vector<1x8x32xf32> to vector<8x32xf32>
      %14 = arith.truncf %13 : vector<8x32xf32> to vector<8x32xbf16>
      %c0_7 = arith.constant 0 : index
      %c0_8 = arith.constant 0 : index
      %15 = vector.load %arg5[%c0_7, %c0_8] : memref<32x48xf32, #tpu.memory_space<vmem>>, vector<32x48xf32>
      %16 = arith.truncf %15 : vector<32x48xf32> to vector<32x48xbf16>
      %cst = arith.constant dense<0.000000e+00> : vector<8x48xf32>
      %17 = tpu.matmul %14, %16, %cst {dimension_numbers = #tpu.dot_dimension_numbers<[1], [0], [0], [1], [0, 0, 1, 1], [], []>} : vector<8x32xbf16>, vector<32x48xbf16>, vector<8x48xf32> -> vector<8x48xf32>
      %18 = vector.extract_strided_slice %17 {offsets = [0, 16], sizes = [8, 16], strides = [1, 1]} : vector<8x48xf32> to vector<8x16xf32>
      %cst_9 = arith.constant 2.500000e-01 : f32
      %19 = vector.broadcast %cst_9 : f32 to vector<8x16xf32>
      %20 = arith.mulf %18, %19 : vector<8x16xf32>
      %c0_10 = arith.constant 0 : index
      %c0_11 = arith.constant 0 : index
      %21 = vector.load %arg7[%c0_10, %c0_11] : memref<8x16xf32, #tpu.memory_space<vmem>>, vector<8x16xf32>
      tpu.vector_store %arg7[%c0_10, %c0_11], %20 {strides = array<i32>} : memref<8x16xf32, #tpu.memory_space<vmem>>, vector<8x16xf32>,
      %cst_12 = arith.constant 0xFF800000 : f32
      %22 = vector.broadcast %cst_12 : f32 to vector<8x1xf32>
      %c0_13 = arith.constant 0 : index
      %c0_14 = arith.constant 0 : index
      %23 = vector.load %arg8[%c0_13, %c0_14] : memref<8x1xf32, #tpu.memory_space<vmem>>, vector<8x1xf32>
      tpu.vector_store %arg8[%c0_13, %c0_14], %22 {strides = array<i32>} : memref<8x1xf32, #tpu.memory_space<vmem>>, vector<8x1xf32>,
      %cst_15 = arith.constant 0.000000e+00 : f32
      %24 = vector.broadcast %cst_15 : f32 to vector<8x1xf32>
      %c0_16 = arith.constant 0 : index
      %c0_17 = arith.constant 0 : index
      %25 = vector.load %arg9[%c0_16, %c0_17] : memref<8x1xf32, #tpu.memory_space<vmem>>, vector<8x1xf32>
      tpu.vector_store %arg9[%c0_16, %c0_17], %24 {strides = array<i32>} : memref<8x1xf32, #tpu.memory_space<vmem>>, vector<8x1xf32>,
      %cst_18 = arith.constant 0.000000e+00 : f32
      %26 = vector.broadcast %cst_18 : f32 to vector<8x16xf32>
      %c0_19 = arith.constant 0 : index
      %c0_20 = arith.constant 0 : index
      %27 = vector.load %arg10[%c0_19, %c0_20] : memref<8x16xf32, #tpu.memory_space<vmem>>, vector<8x16xf32>
      tpu.vector_store %arg10[%c0_19, %c0_20], %26 {strides = array<i32>} : memref<8x16xf32, #tpu.memory_space<vmem>>, vector<8x16xf32>,
    } else {
    }
    %c8_i32 = arith.constant 8 : i32
    %3 = arith.muli %arg2, %c8_i32 : i32
    %c8_i32_1 = arith.constant 8 : i32
    %4 = arith.muli %arg1, %c8_i32_1 : i32
    %c7_i32 = arith.constant 7 : i32
    %5 = arith.addi %4, %c7_i32 : i32
    %6 = arith.cmpi sle, %3, %5 : i32
    %7 = arith.extui %6 : i1 to i32
    %c0_i32_2 = arith.constant 0 : i32
    %8 = arith.cmpi ne, %7, %c0_i32_2 : i32
    scf.if %8 {
      %c0 = arith.constant 0 : index
      %c0_5 = arith.constant 0 : index
      %c0_6 = arith.constant 0 : index
      %12 = vector.load %arg4[%c0, %c0_5, %c0_6] : memref<1x8x32xf32, #tpu.memory_space<vmem>>, vector<1x8x32xf32>
      %13 = vector.shape_cast %12 : vector<1x8x32xf32> to vector<8x32xf32>
      %14 = arith.truncf %13 : vector<8x32xf32> to vector<8x32xbf16>
      %c0_7 = arith.constant 0 : index
      %c0_8 = arith.constant 0 : index
      %15 = vector.load %arg5[%c0_7, %c0_8] : memref<32x48xf32, #tpu.memory_space<vmem>>, vector<32x48xf32>
      %16 = arith.truncf %15 : vector<32x48xf32> to vector<32x48xbf16>
      %cst = arith.constant dense<0.000000e+00> : vector<8x48xf32>
      %17 = tpu.matmul %14, %16, %cst {dimension_numbers = #tpu.dot_dimension_numbers<[1], [0], [0], [1], [0, 0, 1, 1], [], []>} : vector<8x32xbf16>, vector<32x48xbf16>, vector<8x48xf32> -> vector<8x48xf32>
      %18 = vector.extract_strided_slice %17 {offsets = [0, 0], sizes = [8, 16], strides = [1, 1]} : vector<8x48xf32> to vector<8x16xf32>
      %19 = vector.extract_strided_slice %17 {offsets = [0, 32], sizes = [8, 16], strides = [1, 1]} : vector<8x48xf32> to vector<8x16xf32>
      %c0_9 = arith.constant 0 : index
      %c0_10 = arith.constant 0 : index
      %20 = vector.load %arg7[%c0_9, %c0_10] : memref<8x16xf32, #tpu.memory_space<vmem>>, vector<8x16xf32>
      %21 = arith.truncf %20 : vector<8x16xf32> to vector<8x16xbf16>
      %22 = arith.truncf %18 : vector<8x16xf32> to vector<8x16xbf16>
      %cst_11 = arith.constant dense<0.000000e+00> : vector<8x8xf32>
      %23 = tpu.matmul %21, %22, %cst_11 {dimension_numbers = #tpu.dot_dimension_numbers<[1], [1], [0], [0], [0, 0, 1, 0], [], []>} : vector<8x16xbf16>, vector<8x16xbf16>, vector<8x8xf32> -> vector<8x8xf32>
      %c8_i32_12 = arith.constant 8 : i32
      %24 = arith.muli %arg1, %c8_i32_12 : i32
      %25 = tpu.iota {dimensions = array<i32: 0>} : vector<8x1xi32>
      %26 = vector.broadcast %24 : i32 to vector<8x1xi32>
      %27 = arith.addi %26, %25 : vector<8x1xi32>
      %c8_i32_13 = arith.constant 8 : i32
      %28 = arith.muli %arg2, %c8_i32_13 : i32
      %29 = tpu.iota {dimensions = array<i32: 1>} : vector<1x8xi32>
      %30 = vector.broadcast %28 : i32 to vector<1x8xi32>
      %31 = arith.addi %30, %29 : vector<1x8xi32>
      %32 = vector.broadcast %31 : vector<1x8xi32> to vector<8x8xi32>
      %33 = vector.broadcast %27 : vector<8x1xi32> to vector<8x8xi32>
      %34 = arith.cmpi sle, %32, %33 : vector<8x8xi32>
      %cst_14 = arith.constant 0xFF800000 : f32
      %35 = vector.broadcast %cst_14 : f32 to vector<8x8xf32>
      %36 = arith.select %34, %23, %35 : vector<8x8xi1>, vector<8x8xf32>
      %c0_15 = arith.constant 0 : index
      %c0_16 = arith.constant 0 : index
      %37 = vector.load %arg8[%c0_15, %c0_16] : memref<8x1xf32, #tpu.memory_space<vmem>>, vector<8x1xf32>
      %cst_17 = arith.constant dense<0xFF800000> : vector<8xf32>
      %38 = vector.multi_reduction <maximumf>, %36, %cst_17 [1] : vector<8x8xf32> to vector<8xf32>
      %39 = vector.shape_cast %38 : vector<8xf32> to vector<8x1xf32>
      %40 = arith.maximumf %37, %39 : vector<8x1xf32>
      %41 = arith.subf %37, %40 : vector<8x1xf32>
      %42 = math.exp %41 : vector<8x1xf32>
      %43 = vector.broadcast %40 : vector<8x1xf32> to vector<8x8xf32>
      %44 = arith.subf %36, %43 : vector<8x8xf32>
      %45 = math.exp %44 : vector<8x8xf32>
      %c0_18 = arith.constant 0 : index
      %c0_19 = arith.constant 0 : index
      %46 = vector.load %arg9[%c0_18, %c0_19] : memref<8x1xf32, #tpu.memory_space<vmem>>, vector<8x1xf32>
      %47 = arith.mulf %42, %46 : vector<8x1xf32>
      %cst_20 = arith.constant dense<0.000000e+00> : vector<8xf32>
      %48 = vector.multi_reduction <add>, %45, %cst_20 [1] : vector<8x8xf32> to vector<8xf32>
      %49 = vector.shape_cast %48 : vector<8xf32> to vector<8x1xf32>
      %50 = arith.addf %47, %49 : vector<8x1xf32>
      %c0_21 = arith.constant 0 : index
      %c0_22 = arith.constant 0 : index
      %51 = vector.load %arg9[%c0_21, %c0_22] : memref<8x1xf32, #tpu.memory_space<vmem>>, vector<8x1xf32>
      tpu.vector_store %arg9[%c0_21, %c0_22], %50 {strides = array<i32>} : memref<8x1xf32, #tpu.memory_space<vmem>>, vector<8x1xf32>,
      %c0_23 = arith.constant 0 : index
      %c0_24 = arith.constant 0 : index
      %52 = vector.load %arg10[%c0_23, %c0_24] : memref<8x16xf32, #tpu.memory_space<vmem>>, vector<8x16xf32>
      %53 = vector.broadcast %42 : vector<8x1xf32> to vector<8x16xf32>
      %54 = arith.mulf %53, %52 : vector<8x16xf32>
      %55 = arith.truncf %45 : vector<8x8xf32> to vector<8x8xbf16>
      %56 = arith.truncf %19 : vector<8x16xf32> to vector<8x16xbf16>
      %cst_25 = arith.constant dense<0.000000e+00> : vector<8x16xf32>
      %57 = tpu.matmul %55, %56, %cst_25 {dimension_numbers = #tpu.dot_dimension_numbers<[1], [0], [0], [1], [0, 0, 1, 1], [], []>} : vector<8x8xbf16>, vector<8x16xbf16>, vector<8x16xf32> -> vector<8x16xf32>
      %58 = arith.addf %54, %57 : vector<8x16xf32>
      %c0_26 = arith.constant 0 : index
      %c0_27 = arith.constant 0 : index
      %59 = vector.load %arg10[%c0_26, %c0_27] : memref<8x16xf32, #tpu.memory_space<vmem>>, vector<8x16xf32>
      tpu.vector_store %arg10[%c0_26, %c0_27], %58 {strides = array<i32>} : memref<8x16xf32, #tpu.memory_space<vmem>>, vector<8x16xf32>,
      %c0_28 = arith.constant 0 : index
      %c0_29 = arith.constant 0 : index
      %60 = vector.load %arg8[%c0_28, %c0_29] : memref<8x1xf32, #tpu.memory_space<vmem>>, vector<8x1xf32>
      tpu.vector_store %arg8[%c0_28, %c0_29], %40 {strides = array<i32>} : memref<8x1xf32, #tpu.memory_space<vmem>>, vector<8x1xf32>,
    } else {
    }
    %c0_i32_3 = arith.constant 0 : i32
    %9 = arith.cmpi eq, %arg2, %c0_i32_3 : i32
    %10 = arith.extui %9 : i1 to i32
    %c0_i32_4 = arith.constant 0 : i32
    %11 = arith.cmpi ne, %10, %c0_i32_4 : i32
    scf.if %11 {
      %c0 = arith.constant 0 : index
      %c0_5 = arith.constant 0 : index
      %12 = vector.load %arg9[%c0, %c0_5] : memref<8x1xf32, #tpu.memory_space<vmem>>, vector<8x1xf32>
      %13 = tpu.reciprocal %12 {approx = true} : vector<8x1xf32> -> vector<8x1xf32>
      %c0_6 = arith.constant 0 : index
      %c0_7 = arith.constant 0 : index
      %14 = vector.load %arg10[%c0_6, %c0_7] : memref<8x16xf32, #tpu.memory_space<vmem>>, vector<8x16xf32>
      %15 = vector.broadcast %13 : vector<8x1xf32> to vector<8x16xf32>
      %16 = arith.mulf %14, %15 : vector<8x16xf32>
      %c0_8 = arith.constant 0 : index
      %c0_9 = arith.constant 0 : index
      %c0_10 = arith.constant 0 : index
      %17 = vector.load %arg6[%c0_8, %c0_9, %c0_10] : memref<1x8x16xf32, #tpu.memory_space<vmem>>, vector<1x8x16xf32>
      %18 = vector.shape_cast %17 : vector<1x8x16xf32> to vector<8x16xf32>
      %19 = vector.shape_cast %16 : vector<8x16xf32> to vector<1x8x16xf32>
      tpu.vector_store %arg6[%c0_8, %c0_9, %c0_10], %19 {strides = array<i32>} : memref<1x8x16xf32, #tpu.memory_space<vmem>>, vector<1x8x16xf32>,
    } else {
    }
    return
  }
  func.func @transform_0(%arg0: i32, %arg1: i32, %arg2: i32) -> (i32, i32, i32) {
    %c0_i32 = arith.constant 0 : i32
    %c0_i32_0 = arith.constant 0 : i32
    return %arg0, %arg1, %c0_i32 : i32, i32, i32
  }
  func.func @transform_1(%arg0: i32, %arg1: i32, %arg2: i32) -> (i32, i32, i32) {
    %c0_i32 = arith.constant 0 : i32
    %c0_i32_0 = arith.constant 0 : i32
    return %arg0, %arg2, %c0_i32 : i32, i32, i32
  }
  func.func @transform_2(%arg0: i32, %arg1: i32, %arg2: i32) -> (i32, i32) {
    %c0_i32 = arith.constant 0 : i32
    %c0_i32_0 = arith.constant 0 : i32
    %c0_i32_1 = arith.constant 0 : i32
    return %c0_i32, %c0_i32_0 : i32, i32
  }
  func.func @transform_3(%arg0: i32, %arg1: i32, %arg2: i32) -> (i32, i32, i32) {
    %c0_i32 = arith.constant 0 : i32
    %c0_i32_0 = arith.constant 0 : i32
    return %arg0, %arg1, %c0_i32 : i32, i32, i32
  }
}

</mosaic_0001>

<llo_original>
// kernel: attention_head.1
$region0: #{attention_head.1}
  #allocation0 [shape = 'u32[]', space=smem, size = 0x4, offset = 0x4, fixed_abs, tag = 'smem constant byte address 0x4 - core index']
  #allocation1 [shape = 'u32[144,128]{1,0:T(1,128)}', space=vmem, size = 0x12000, scoped, tag = 'internal scratch']
  #allocation2 [shape = 'f32[8,16]{1,0:T(8,128)}', space=vmem, size = 0x1000, scoped, tag = 'scratch operand']
  #allocation3 [shape = 'f32[8,1]{1,0:T(8,128)}', space=vmem, size = 0x1000, scoped, tag = 'scratch operand']
  #allocation4 [shape = 'f32[8,1]{1,0:T(8,128)}', space=vmem, size = 0x1000, scoped, tag = 'scratch operand']
  #allocation5 [shape = 'f32[8,16]{1,0:T(8,128)}', space=vmem, size = 0x1000, scoped, tag = 'scratch operand']
  %s0 = inlined_call_operand.vmem [shape: f32[2,8,32], index: 0, kind: input, shape index: {}, may-alias: {0,1}]
  %s1 = inlined_call_operand.vmem [shape: f32[2,8,32], index: 1, kind: input, shape index: {}, may-alias: {0,1}]
  %s2 = inlined_call_operand.vmem [shape: f32[32,48], index: 2, kind: input, shape index: {}]
  %s3 = inlined_call_operand.hbm [shape: f32[2,8,16], index: 3, kind: output, shape index: {}]
  %s4 = sld [smem:[#allocation0]]
  $region57: #{attention_head.1} parent=0
    _
  %s6 = ssub.s32 1, %s4
  %s7 = scalar_select 0, %s6, %s4
  $region1: #{attention_head.1} parent=0
    #allocation6 [shape = 'u8[8192]{0}', space=vmem, size = 0x2000, scoped, tag = 'output window, operand 0']
    #allocation7 [shape = 's32[2]{0}', space=sflag, size = 0x8, scoped, tag = 'scoped memory for attention_head.1']
    %8 = vsyncpa [#allocation7], 0
    %s9 = scalar_lea.sflag [#allocation7], 1
    %10 = vsyncpa %s9, 0
    loop: start=0, step=1, limit=4
    $region2: #{attention_head.1} parent=1 // loop_pre_header
      _
    $region3: #{attention_head.1} parent=1 // loop_header
      %s12 = sphi 0, %s16
      %p13 = scmp.ge.s32.totalorder %s12, 4
      %s19 = sphi 0, %s38
      %s20 = sphi 0, %s34
      %s21 = sphi 0, %s30
      %s22 = sphi 0, %s19
      %s23 = sphi 0, %s20
      %s24 = sphi 0, %s21
      %s25 = sphi 0, %s22
      %s26 = sphi 0, %s23
      %s27 = sphi 0, %s24
      %s43 = sphi 0, %s45
      %s46 = sphi 0, %s43
      %s47 = sphi 0, %s46
      %s63 = sphi 0, %s47
      %s71 = sphi 0, %s73
      %s74 = sphi 0, %s71
      %s75 = sphi 0, %s74
      %s91 = sphi 0, %s75
      %s95 = sphi 0, %s95
      %s97 = sphi 0, %s95
      %s98 = sphi 0, %s97
      %s112 = sphi 0, %s98
      %s120 = sphi 0, %s122
      %s123 = sphi 0, %s120
      %s124 = sphi 0, %s123
      %s140 = sphi 0, %s124
    $region4: #{attention_head.1} parent=1 // loop_header_branch
      %15 = sbr.rel (%p13) target = $region8
    $region5: #{attention_head.1} parent=1 // loop_body
      %s17 = ssub.s32 %s12, 1
      %s18 = ssub.s32 %s12, 2
      %s28 = sadd.s32 1, %s21
      %p29 = scmp.ge.s32.totalorder %s28, 1
      %s30 = scalar_select %p29, 0, %s28
      %s31 = sadd.s32 1, %s20
      %s32 = scalar_select %p29, %s31, %s20
      %p33 = scmp.ge.s32.totalorder %s32, 1
      %s34 = scalar_select %p33, 0, %s32
      %s35 = sadd.s32 1, %s19
      %s36 = scalar_select %p33, %s35, %s19
      %p37 = scmp.ge.s32.totalorder %s36, 2
      %s38 = scalar_select %p37, 0, %s36
      %s39 = ssub.s32 %s19, %s38
      %s40 = ssub.s32 %s20, %s34
      %s41 = sor.u32 %s39, %s40
      %p42 = scmp.eq.s32.totalorder %s41, 0
      %s44 = sadd.s32 %s43, 1
      %s45 = scalar_select %p42, %s43, %s44
      %p48 = pneg %p42
      %p49 = scmp.eq.s32.totalorder %s12, 1
      %p50 = por %p48, %p49
      %p51 = scmp.ne.s32.totalorder %s43, %s46
      %p52 = scmp.eq.s32.totalorder %s12, 0
      %p53 = por %p51, %p52
      %p54 = scmp.ne.s32.totalorder %s43, %s46
      %p55 = scmp.eq.s32.totalorder %s17, 1
      %p56 = por %p54, %p55
      %p57 = scmp.ne.s32.totalorder %s46, %s47
      %p58 = scmp.eq.s32.totalorder %s17, 0
      %p59 = por %p57, %p58
      %p60 = scmp.ne.s32.totalorder %s46, %s47
      %p61 = scmp.eq.s32.totalorder %s18, 1
      %p62 = por %p60, %p61
      %p64 = scmp.ne.s32.totalorder %s47, %s63
      %p65 = scmp.eq.s32.totalorder %s18, 0
      %p66 = por %p64, %p65
      %s67 = ssub.s32 %s19, %s38
      %s68 = ssub.s32 %s21, %s30
      %s69 = sor.u32 %s67, %s68
      %p70 = scmp.eq.s32.totalorder %s69, 0
      %s72 = sadd.s32 %s71, 1
      %s73 = scalar_select %p70, %s71, %s72
      %p76 = pneg %p70
      %p77 = scmp.eq.s32.totalorder %s12, 1
      %p78 = por %p76, %p77
      %p79 = scmp.ne.s32.totalorder %s71, %s74
      %p80 = scmp.eq.s32.totalorder %s12, 0
      %p81 = por %p79, %p80
      %p82 = scmp.ne.s32.totalorder %s71, %s74
      %p83 = scmp.eq.s32.totalorder %s17, 1
      %p84 = por %p82, %p83
      %p85 = scmp.ne.s32.totalorder %s74, %s75
      %p86 = scmp.eq.s32.totalorder %s17, 0
      %p87 = por %p85, %p86
      %p88 = scmp.ne.s32.totalorder %s74, %s75
      %p89 = scmp.eq.s32.totalorder %s18, 1
      %p90 = por %p88, %p89
      %p92 = scmp.ne.s32.totalorder %s75, %s91
      %p93 = scmp.eq.s32.totalorder %s18, 0
      %p94 = por %p92, %p93
      %s96 = sadd.s32 %s95, 1
      %p99 = scmp.eq.s32.totalorder %s12, 1
      %p100 = scmp.ne.s32.totalorder %s95, %s97
      %p101 = scmp.eq.s32.totalorder %s12, 0
      %p102 = por %p100, %p101
      %p103 = scmp.ne.s32.totalorder %s95, %s97
      %p104 = scmp.eq.s32.totalorder %s17, 1
      %p105 = por %p103, %p104
      %p106 = scmp.ne.s32.totalorder %s97, %s98
      %p107 = scmp.eq.s32.totalorder %s17, 0
      %p108 = por %p106, %p107
      %p109 = scmp.ne.s32.totalorder %s97, %s98
      %p110 = scmp.eq.s32.totalorder %s18, 1
      %p111 = por %p109, %p110
      %p113 = scmp.ne.s32.totalorder %s98, %s112
      %p114 = scmp.eq.s32.totalorder %s18, 0
      %p115 = por %p113, %p114
      %s116 = ssub.s32 %s19, %s38
      %s117 = ssub.s32 %s20, %s34
      %s118 = sor.u32 %s116, %s117
      %p119 = scmp.eq.s32.totalorder %s118, 0
      %s121 = sadd.s32 %s120, 1
      %s122 = scalar_select %p119, %s120, %s121
      %p125 = pneg %p119
      %p126 = scmp.eq.s32.totalorder %s12, 1
      %p127 = por %p125, %p126
      %p128 = scmp.ne.s32.totalorder %s120, %s123
      %p129 = scmp.eq.s32.totalorder %s12, 0
      %p130 = por %p128, %p129
      %p131 = scmp.ne.s32.totalorder %s120, %s123
      %p132 = scmp.eq.s32.totalorder %s17, 1
      %p133 = por %p131, %p132
      %p134 = scmp.ne.s32.totalorder %s123, %s124
      %p135 = scmp.eq.s32.totalorder %s17, 0
      %p136 = por %p134, %p135
      %p137 = scmp.ne.s32.totalorder %s123, %s124
      %p138 = scmp.eq.s32.totalorder %s18, 1
      %p139 = por %p137, %p138
      %p141 = scmp.ne.s32.totalorder %s124, %s140
      %p142 = scmp.eq.s32.totalorder %s18, 0
      %p143 = por %p141, %p142
      %p144 = scmp.le.s32.totalorder 1, %s12
      %p145 = scmp.lt.s32.totalorder %s12, 3
      %p146 = pnand %p144, %p145
      %p147 = pneg %p146
      // Predicated region
      $region9: #{attention_head.1} parent=5 // pred_check
        _
      $region10: #{attention_head.1} parent=5 // pred_check_branch
        %149 = sbr.rel (%p146) target = $region12
      $region11: #{attention_head.1} parent=5 // pred_region
        %s150 = ssub.s32 %s12, 1
        // Predicated region
        $region13: #{attention_head.1} parent=11 // pred_check
          %p151 = pneg %p108
        $region14: #{attention_head.1} parent=11 // pred_check_branch
          %153 = sbr.rel (%p151) target = $region16
        $region15: #{attention_head.1} parent=11 // pred_region
          _
        $region16: #{attention_head.1} parent=11 // pred_fallthru
          _
      $region12: #{attention_head.1} parent=5 // pred_fallthru
        _
      %p154 = scmp.lt.s32.totalorder %s12, 2
      // Predicated region
      $region17: #{attention_head.1} parent=5 // pred_check
        %p155 = pneg %p154
      $region18: #{attention_head.1} parent=5 // pred_check_branch
        %157 = sbr.rel (%p155) target = $region20
      $region19: #{attention_head.1} parent=5 // pred_region
        // Predicated region
        $region21: #{attention_head.1} parent=19 // pred_check
          %p158 = pneg %p53
        $region22: #{attention_head.1} parent=19 // pred_check_branch
          %160 = sbr.rel (%p158) target = $region24
        $region23: #{attention_head.1} parent=19 // pred_region
          %p161 = scmp.lt.s32.totalorder %s19, 1
          %s162 = scalar_select %p161, %s19, 1
          %p163 = scmp.lt.s32.totalorder %s20, 0
          %s164 = scalar_select %p163, %s20, 0
          %s165 = sadd.s32 %s164, %s162
          %s166 = smul.addr %s165, 8
          %s167 = scalar_lea.vmem %s0, %s166
        $region24: #{attention_head.1} parent=19 // pred_fallthru
          _
        // Predicated region
        $region25: #{attention_head.1} parent=19 // pred_check
          %p168 = pneg %p81
        $region26: #{attention_head.1} parent=19 // pred_check_branch
          %170 = sbr.rel (%p168) target = $region28
        $region27: #{attention_head.1} parent=19 // pred_region
          %p171 = scmp.lt.s32.totalorder %s19, 1
          %s172 = scalar_select %p171, %s19, 1
          %p173 = scmp.lt.s32.totalorder %s21, 0
          %s174 = scalar_select %p173, %s21, 0
          %s175 = sadd.s32 %s174, %s172
          %s176 = smul.addr %s175, 8
          %s177 = scalar_lea.vmem %s1, %s176
        $region28: #{attention_head.1} parent=19 // pred_fallthru
          _
      $region20: #{attention_head.1} parent=5 // pred_fallthru
        _
      %p178 = scmp.le.s32.totalorder 1, %s12
      %p179 = scmp.lt.s32.totalorder %s12, 3
      %p180 = pnand %p178, %p179
      %p181 = pneg %p180
      // Predicated region
      $region29: #{attention_head.1} parent=5 // pred_check
        _
      $region30: #{attention_head.1} parent=5 // pred_check_branch
        %183 = sbr.rel (%p180) target = $region32
      $region31: #{attention_head.1} parent=5 // pred_region
        %s184 = ssub.s32 %s12, 1
        %p185 = scmp.lt.s32.totalorder %s22, 1
        %s186 = scalar_select %p185, %s22, 1
        %p187 = scmp.lt.s32.totalorder %s23, 0
        %s188 = scalar_select %p187, %s23, 0
        %s189 = sadd.s32 %s188, %s186
        %s190 = smul.addr %s189, 8
        %s191 = scalar_lea.vmem %s0, %s190
        %p192 = pneg %p59
        %p193 = pneg %p56
        %p194 = scmp.lt.s32.totalorder %s22, 1
        %s195 = scalar_select %p194, %s22, 1
        %p196 = scmp.lt.s32.totalorder %s24, 0
        %s197 = scalar_select %p196, %s24, 0
        %s198 = sadd.s32 %s197, %s195
        %s199 = smul.addr %s198, 8
        %s200 = scalar_lea.vmem %s1, %s199
        %p201 = pneg %p87
        %p202 = pneg %p84
        %p203 = pneg %p108
        %p204 = pneg %p105
        %p205 = pneg %p136
        %p206 = pneg %p133
        %s207 = sand.u32 %s123, 1
        %s208 = scalar_lea.sflag [#allocation7], %s207
        %s209 = sand.u32 %s123, 1
        %s210 = smul.addr %s209, 8
        %s211 = scalar_lea.vmem [#allocation6], %s210
        %p212 = scmp.lt.s32.totalorder %s22, 1
        %s213 = scalar_select %p212, %s22, 1
        %p214 = scmp.lt.s32.totalorder %s23, 0
        %s215 = scalar_select %p214, %s23, 0
        %s216 = sadd.s32 %s215, %s213
        %s217 = smul.addr %s216, 8
        %s218 = scalar_lea.vmem %s0, %s217
        %p219 = scmp.lt.s32.totalorder %s22, 1
        %s220 = scalar_select %p219, %s22, 1
        %p221 = scmp.lt.s32.totalorder %s24, 0
        %s222 = scalar_select %p221, %s24, 0
        %s223 = sadd.s32 %s222, %s220
        %s224 = smul.addr %s223, 8
        %s225 = scalar_lea.vmem %s1, %s224
        %p227 = scmp.eq.s32.totalorder %s24, 0
        // Predicated region
        $region33: #{attention_head.1} parent=31 // pred_check
          %p228 = pneg %p227
        $region34: #{attention_head.1} parent=31 // pred_check_branch
          %230 = sbr.rel (%p228) target = $region36
        $region35: #{attention_head.1} parent=31 // pred_region
          %v231 = vld [vmem:[%s218] sm:$0xff]
          %v232 = vpack.c.bf16 %v231, %v231
          %v233 = vld [vmem:[%s2] sm:$0xff]
          %v234 = vld [vmem:[%s2 + $0x8] sm:$0xff]
          %v235 = vld [vmem:[%s2 + $0x10] sm:$0xff]
          %v236 = vld [vmem:[%s2 + $0x18] sm:$0xff]
          %v237 = vpack.c.bf16 %v234, %v233
          %v238 = vpack.c.bf16 %v236, %v235
          %vm239 = vcmask 261120
          %v241 = vsel %vm239, %v232, 0
          %243 = vmatprep.subr.bf16.mxu0 0
          %244 = vmatpush1.bf16.msra.mxu0 %v237
          %245 = vmatprep.subr.bf16.mxu0 0
          %246 = vmatpush1.bf16.msra.mxu0 %v238
          %247 = vmatprep.subr.bf16.mxu0 0
          %248 = vmatpush1.bf16.msra.mxu0 0
          %249 = vmatprep.subr.bf16.mxu0 0
          %250 = vmatpush1.bf16.msra.mxu0 0
          %251 = vmatprep.subr.bf16.mxu0 0
          %252 = vmatpush1.bf16.msra.mxu0 0
          %253 = vmatprep.subr.bf16.mxu0 0
          %254 = vmatpush1.bf16.msra.mxu0 0
          %255 = vmatprep.subr.bf16.mxu0 0
          %256 = vmatpush1.bf16.msra.mxu0 0
          %257 = vmatprep.subr.bf16.mxu0 0
          %258 = vmatpush1.bf16.msra.mxu0 0
          %259 = vmatprep.subr.bf16.mxu0 0
          %260 = vmatpush1.bf16.msra.mxu0 0
          %261 = vmatprep.subr.bf16.mxu0 0
          %262 = vmatpush1.bf16.msra.mxu0 0
          %263 = vmatprep.subr.bf16.mxu0 0
          %264 = vmatpush1.bf16.msra.mxu0 0
          %265 = vmatprep.subr.bf16.mxu0 0
          %266 = vmatpush1.bf16.msra.mxu0 0
          %267 = vmatprep.subr.bf16.mxu0 0
          %268 = vmatpush1.bf16.msra.mxu0 0
          %269 = vmatprep.subr.bf16.mxu0 0
          %270 = vmatpush1.bf16.msra.mxu0 0
          %271 = vmatprep.subr.bf16.mxu0 0
          %272 = vmatpush1.bf16.msra.mxu0 0
          %273 = vmatprep.subr.bf16.mxu0 0
          %274 = vmatpush1.bf16.msra.mxu0 0
          %275 = vmatprep.mubr.bf16.mxu0 0
          %276 = vmatmul.mubr.bf16.gmra.mrb[0].mxu0 %v241
          %v277 = vpop.f32.mrb[0].mxu0
          %v278 = vadd.f32 0.0, %v277
          %v279 = vpop.f32.mrb[0].mxu0
          %v280 = vpop.f32.mrb[0].mxu0
          %v281 = vpop.f32.mrb[0].mxu0
          %282 = vdwg.mxu0
          %v283 = vmul.f32 %v278, 0.25
          %285 = vrot.lane.b32.xlu0 %v283, 112
          %v286 = vpop.permute.xlu0 %285
          %vm288 = vcmask 130048
          %289 = vst.msk [vmem:[#allocation2] sm:$0xff] %vm288, %v286
          %vm290 = vcmask 7168
          %291 = vst.msk [vmem:[#allocation3] sm:$0xff] %vm290, -inf
          %292 = vst.msk [vmem:[#allocation4] sm:$0xff] %vm290, 0.0
          %293 = vst.msk [vmem:[#allocation5] sm:$0xff] %vm288, 0.0
        $region36: #{attention_head.1} parent=31 // pred_fallthru
          _
        %s294 = smul.u32 %s24, 8
        %s295 = smul.u32 %s23, 8
        %s296 = sadd.s32 %s295, 7
        %p297 = scmp.le.s32.totalorder %s294, %s296
        // Predicated region
        $region37: #{attention_head.1} parent=31 // pred_check
          %p298 = pneg %p297
        $region38: #{attention_head.1} parent=31 // pred_check_branch
          %300 = sbr.rel (%p298) target = $region40
        $region39: #{attention_head.1} parent=31 // pred_region
          %v301 = vld [vmem:[%s225] sm:$0xff]
          %v302 = vpack.c.bf16 %v301, %v301
          %v303 = vld [vmem:[%s2] sm:$0xff]
          %v304 = vld [vmem:[%s2 + $0x8] sm:$0xff]
          %v305 = vld [vmem:[%s2 + $0x10] sm:$0xff]
          %v306 = vld [vmem:[%s2 + $0x18] sm:$0xff]
          %v307 = vpack.c.bf16 %v304, %v303
          %v308 = vpack.c.bf16 %v306, %v305
          %vm309 = vcmask 261120
          %v311 = vsel %vm309, %v302, 0
          %313 = vmatprep.subr.bf16.mxu0 0
          %314 = vmatpush1.bf16.msra.mxu0 %v307
          %315 = vmatprep.subr.bf16.mxu0 0
          %316 = vmatpush1.bf16.msra.mxu0 %v308
          %317 = vmatprep.subr.bf16.mxu0 0
          %318 = vmatpush1.bf16.msra.mxu0 0
          %319 = vmatprep.subr.bf16.mxu0 0
          %320 = vmatpush1.bf16.msra.mxu0 0
          %321 = vmatprep.subr.bf16.mxu0 0
          %322 = vmatpush1.bf16.msra.mxu0 0
          %323 = vmatprep.subr.bf16.mxu0 0
          %324 = vmatpush1.bf16.msra.mxu0 0
          %325 = vmatprep.subr.bf16.mxu0 0
          %326 = vmatpush1.bf16.msra.mxu0 0
          %327 = vmatprep.subr.bf16.mxu0 0
          %328 = vmatpush1.bf16.msra.mxu0 0
          %329 = vmatprep.subr.bf16.mxu0 0
          %330 = vmatpush1.bf16.msra.mxu0 0
          %331 = vmatprep.subr.bf16.mxu0 0
          %332 = vmatpush1.bf16.msra.mxu0 0
          %333 = vmatprep.subr.bf16.mxu0 0
          %334 = vmatpush1.bf16.msra.mxu0 0
          %335 = vmatprep.subr.bf16.mxu0 0
          %336 = vmatpush1.bf16.msra.mxu0 0
          %337 = vmatprep.subr.bf16.mxu0 0
          %338 = vmatpush1.bf16.msra.mxu0 0
          %339 = vmatprep.subr.bf16.mxu0 0
          %340 = vmatpush1.bf16.msra.mxu0 0
          %341 = vmatprep.subr.bf16.mxu0 0
          %342 = vmatpush1.bf16.msra.mxu0 0
          %343 = vmatprep.subr.bf16.mxu0 0
          %344 = vmatpush1.bf16.msra.mxu0 0
          %345 = vmatprep.mubr.bf16.mxu0 0
          %346 = vmatmul.mubr.bf16.gmra.mrb[0].mxu0 %v311
          %v347 = vpop.f32.mrb[0].mxu0
          %v348 = vadd.f32 0.0, %v347
          %v349 = vpop.f32.mrb[0].mxu0
          %v350 = vpop.f32.mrb[0].mxu0
          %v351 = vpop.f32.mrb[0].mxu0
          %352 = vdwg.mxu0
          %v353 = vld [vmem:[#allocation2] sm:$0xff]
          %v354 = vpack.c.bf16 %v353, %v353
          %v355 = vpack.c.bf16 %v348, %v348
          %vm356 = vcmask 130048
          %v358 = vsel %vm356, %v354, 0
          %v361 = vsel %vm356, %v355, 0
          %363 = vmatprep.subr.bf16.mxu0 0
          %364 = vmatpush1.bf16.xpose.msra.mxu0 %v361
          %365 = vmatprep.subr.bf16.mxu0 0
          %366 = vmatpush1.bf16.xpose.msra.mxu0 0
          %367 = vmatprep.subr.bf16.mxu0 0
          %368 = vmatpush1.bf16.xpose.msra.mxu0 0
          %369 = vmatprep.subr.bf16.mxu0 0
          %370 = vmatpush1.bf16.xpose.msra.mxu0 0
          %371 = vmatprep.subr.bf16.mxu0 0
          %372 = vmatpush1.bf16.xpose.msra.mxu0 0
          %373 = vmatprep.subr.bf16.mxu0 0
          %374 = vmatpush1.bf16.xpose.msra.mxu0 0
          %375 = vmatprep.subr.bf16.mxu0 0
          %376 = vmatpush1.bf16.xpose.msra.mxu0 0
          %377 = vmatprep.subr.bf16.mxu0 0
          %378 = vmatpush1.bf16.xpose.msra.mxu0 0
          %379 = vmatprep.subr.bf16.mxu0 0
          %380 = vmatpush1.bf16.xpose.msra.mxu0 0
          %381 = vmatprep.subr.bf16.mxu0 0
          %382 = vmatpush1.bf16.xpose.msra.mxu0 0
          %383 = vmatprep.subr.bf16.mxu0 0
          %384 = vmatpush1.bf16.xpose.msra.mxu0 0
          %385 = vmatprep.subr.bf16.mxu0 0
          %386 = vmatpush1.bf16.xpose.msra.mxu0 0
          %387 = vmatprep.subr.bf16.mxu0 0
          %388 = vmatpush1.bf16.xpose.msra.mxu0 0
          %389 = vmatprep.subr.bf16.mxu0 0
          %390 = vmatpush1.bf16.xpose.msra.mxu0 0
          %391 = vmatprep.subr.bf16.mxu0 0
          %392 = vmatpush1.bf16.xpose.msra.mxu0 0
          %393 = vmatprep.subr.bf16.mxu0 0
          %394 = vmatpush1.bf16.xpose.msra.mxu0 0
          %395 = vmatprep.mubr.bf16.mxu0 0
          %396 = vmatmul.mubr.bf16.gmra.mrb[0].mxu0 %v358
          %v397 = vpop.f32.mrb[0].mxu0
          %v398 = vadd.f32 0.0, %v397
          %v399 = vpop.f32.mrb[0].mxu0
          %v400 = vpop.f32.mrb[0].mxu0
          %v401 = vpop.f32.mrb[0].mxu0
          %402 = vdwg.mxu0
          %v403 = vlaneseq
          %v404 = vshrl.u32 %v403, 7
          %v405 = vstv %s295
          %v406 = vadd.s32 %v405, %v404
          %v407 = vlaneseq
          %v408 = vand.u32 %v407, 127
          %v409 = vstv %s294
          %v410 = vadd.s32 %v409, %v408
          %vm411 = vcmp.le.s32.totalorder %v410, %v406
          %v412 = vsel %vm411, %v398, -inf
          %v413 = vld [vmem:[#allocation3] sm:$0xff]
          %vm414 = vcmask 64512
          %v415 = vsel %vm414, %v412, -inf
          %416 = vmax.xlane.f32.xlu0 %v415
          %v417 = vpop.xlane.xlu0 %416
          %v418 = vmax.f32 %v413, %v417
          %v419 = vsub.f32 %v413, %v418
          %v420 = vmul.f32 %v419, 1.442695
          %v421 = vpow.pop %v420
          %423 = vset.pattern.permute.xlu0 0
          %424 = vperm.xlu0 %423, %v418
          %v425 = vpop.permute.xlu0 %424
          %v427 = vsub.f32 %v412, %v425
          %v428 = vmul.f32 %v427, 1.442695
          %v429 = vpow.pop %v428
          %v430 = vld [vmem:[#allocation4] sm:$0xff]
          %v431 = vmul.f32 %v421, %v430
          %v432 = vsel %vm414, %v429, 0.0
          %433 = vadd.xlane.f32.xlu0 %v432
          %v434 = vpop.xlane.xlu0 %433
          %v435 = vadd.f32 %v431, %v434
          %vm436 = vcmask 7168
          %437 = vst.msk [vmem:[#allocation4] sm:$0xff] %vm436, %v435
          %v438 = vld [vmem:[#allocation5] sm:$0xff]
          %440 = vset.pattern.permute.xlu0 0
          %441 = vperm.xlu0 %440, %v421
          %v442 = vpop.permute.xlu0 %441
          %v444 = vmul.f32 %v442, %v438
          %v445 = vpack.c.bf16 %v429, %v429
          %447 = vrot.lane.b32.xlu0 %v355, 96
          %v448 = vpop.permute.xlu0 %447
          %v450 = vsel %vm414, %v445, 0
          %vm452 = vcmask 1043456
          %v454 = vsel %vm452, %v448, 0
          %456 = vmatprep.subr.bf16.mxu0 0
          %457 = vmatpush1.bf16.msra.mxu0 %v454
          %458 = vmatprep.subr.bf16.mxu0 0
          %459 = vmatpush1.bf16.msra.mxu0 0
          %460 = vmatprep.subr.bf16.mxu0 0
          %461 = vmatpush1.bf16.msra.mxu0 0
          %462 = vmatprep.subr.bf16.mxu0 0
          %463 = vmatpush1.bf16.msra.mxu0 0
          %464 = vmatprep.subr.bf16.mxu0 0
          %465 = vmatpush1.bf16.msra.mxu0 0
          %466 = vmatprep.subr.bf16.mxu0 0
          %467 = vmatpush1.bf16.msra.mxu0 0
          %468 = vmatprep.subr.bf16.mxu0 0
          %469 = vmatpush1.bf16.msra.mxu0 0
          %470 = vmatprep.subr.bf16.mxu0 0
          %471 = vmatpush1.bf16.msra.mxu0 0
          %472 = vmatprep.subr.bf16.mxu0 0
          %473 = vmatpush1.bf16.msra.mxu0 0
          %474 = vmatprep.subr.bf16.mxu0 0
          %475 = vmatpush1.bf16.msra.mxu0 0
          %476 = vmatprep.subr.bf16.mxu0 0
          %477 = vmatpush1.bf16.msra.mxu0 0
          %478 = vmatprep.subr.bf16.mxu0 0
          %479 = vmatpush1.bf16.msra.mxu0 0
          %480 = vmatprep.subr.bf16.mxu0 0
          %481 = vmatpush1.bf16.msra.mxu0 0
          %482 = vmatprep.subr.bf16.mxu0 0
          %483 = vmatpush1.bf16.msra.mxu0 0
          %484 = vmatprep.subr.bf16.mxu0 0
          %485 = vmatpush1.bf16.msra.mxu0 0
          %486 = vmatprep.subr.bf16.mxu0 0
          %487 = vmatpush1.bf16.msra.mxu0 0
          %488 = vmatprep.mubr.bf16.mxu0 0
          %489 = vmatmul.mubr.bf16.gmra.mrb[0].mxu0 %v450
          %v490 = vpop.f32.mrb[0].mxu0
          %v491 = vadd.f32 0.0, %v490
          %v492 = vpop.f32.mrb[0].mxu0
          %v493 = vpop.f32.mrb[0].mxu0
          %v494 = vpop.f32.mrb[0].mxu0
          %495 = vdwg.mxu0
          %v496 = vadd.f32 %v444, %v491
          %497 = vst.msk [vmem:[#allocation5] sm:$0xff] %vm356, %v496
          %498 = vst.msk [vmem:[#allocation3] sm:$0xff] %vm436, %v418
        $region40: #{attention_head.1} parent=31 // pred_fallthru
          _
        // Predicated region
        $region41: #{attention_head.1} parent=31 // pred_check
          %p499 = pneg %p227
        $region42: #{attention_head.1} parent=31 // pred_check_branch
          %501 = sbr.rel (%p499) target = $region44
        $region43: #{attention_head.1} parent=31 // pred_region
          %v502 = vld [vmem:[#allocation4] sm:$0xff]
          %v503 = vrcp.pop %v502
          %v504 = vld [vmem:[#allocation5] sm:$0xff]
          %506 = vset.pattern.permute.xlu0 0
          %507 = vperm.xlu0 %506, %v503
          %v508 = vpop.permute.xlu0 %507
          %v510 = vmul.f32 %v504, %v508
          %vm511 = vcmask 130048
          %512 = vst.msk [vmem:[%s211] sm:$0xff] %vm511, %v510
        $region44: #{attention_head.1} parent=31 // pred_fallthru
          _
        %s513 = sand.u32 %s123, 1
        %s514 = scalar_lea.sflag [#allocation7], %s513
        %s515 = sand.u32 %s123, 1
        %s516 = smul.addr %s515, 8
        %s517 = scalar_lea.vmem [#allocation6], %s516
        // Predicated region
        $region45: #{attention_head.1} parent=31 // pred_check
          %p518 = pneg %p133
        $region46: #{attention_head.1} parent=31 // pred_check_branch
          %520 = sbr.rel (%p518) target = $region48
        $region47: #{attention_head.1} parent=31 // pred_region
          %s522 = ssub.s32 128, 128
          %523 = vsyncadd %s514, %s522
          %s524 = sadd.s32 %s23, %s22
          %s525 = smul.addr %s524, 128
          %s526 = scalar_lea.hbm %s3, %s525
          %s528 = sshll.u32 %s517, 4
          %s529 = int_to_ptr.vmem [resolvable:$true] %s528
          %531 = dma.vmem_to_hbm [thread:$0]  %s529, 128, %s526, %s514
        $region48: #{attention_head.1} parent=31 // pred_fallthru
          _
      $region32: #{attention_head.1} parent=5 // pred_fallthru
        _
      %p532 = scmp.le.s32.totalorder 2, %s12
      // Predicated region
      $region49: #{attention_head.1} parent=5 // pred_check
        %p533 = pneg %p532
      $region50: #{attention_head.1} parent=5 // pred_check_branch
        %535 = sbr.rel (%p533) target = $region52
      $region51: #{attention_head.1} parent=5 // pred_region
        %s536 = ssub.s32 %s12, 2
        // Predicated region
        $region53: #{attention_head.1} parent=51 // pred_check
          %p537 = pneg %p139
        $region54: #{attention_head.1} parent=51 // pred_check_branch
          %539 = sbr.rel (%p537) target = $region56
        $region55: #{attention_head.1} parent=51 // pred_region
          %s540 = sand.u32 %s124, 1
          %s541 = scalar_lea.sflag [#allocation7], %s540
          %s542 = sand.u32 %s124, 1
          %s543 = smul.addr %s542, 8
          %s544 = scalar_lea.vmem [#allocation6], %s543
          %545 = dma.done %s541, 128
        $region56: #{attention_head.1} parent=51 // pred_fallthru
          _
      $region52: #{attention_head.1} parent=5 // pred_fallthru
        _
    $region6: #{attention_head.1} parent=1 // loop_footer
      %s16 = sadd.s32 1, %s12
    $region7: #{attention_head.1} parent=1 // loop_footer_branch
      %11 = sbr.rel target = $region3
    $region8: #{attention_head.1} parent=1 // loop_exit
      _
    %546 = vsyncpa [#allocation7], 1
    %s547 = scalar_lea.sflag [#allocation7], 1
    %548 = vsyncpa %s547, 1

</llo_original>
